<compile_context>
chip_gen: v6e
topology: v6e:2x2x1
jax: 0.10.0
libtpu: 0.0.40
codegen_flags: <defaults>
</compile_context>

<pallas_src>
import functools
import math

import jax
import jax.numpy as jnp
from jax import lax
from jax.experimental import pallas as pl
from jax.experimental.pallas import tpu as pltpu


def _round_up(x, m):
    return (x + m - 1) // m * m


def _pick_tile(b_pad, cap):
    """Largest multiple of 128 that divides b_pad and is <= cap (>= 128)."""
    best = 128
    t = 256
    while t <= min(cap, b_pad):
        if b_pad % t == 0:
            best = t
        t += 128
    return best


def _vmem_capacity_bytes():
    try:
        cap = getattr(pltpu.get_tpu_info(), "vmem_capacity_bytes", None)
        if cap:
            return int(cap)
    except Exception:
        pass
    return 64 * 1024 * 1024  # conservative default (v7x per-TC VMEM)


# --------------------------- stage 1: normalize -------------------------------
def _normalize_kernel(x_ref, fn_ref, *, scale):
    v = x_ref[...].astype(jnp.float32)
    ss = jnp.sum(v * v, axis=1, keepdims=True)
    # F.normalize: x / max(||x||, 1e-12) == x * rsqrt(max(sumsq, 1e-24));
    # temperature folded in as a rsqrt(t) factor per row (single EUP rsqrt).
    xn = v * (lax.rsqrt(jnp.maximum(ss, jnp.float32(1e-24))) * scale)
    fn_ref[...] = xn.astype(jnp.bfloat16)   # bf16 residency for stage 2


# ------------------- stage 2: tiled logits + online LSE -----------------------
def _ntxent_lse_kernel(*refs, tm, tn, b_valid, b_pad, n_col_blocks, inv_t,
                       resident):
    if resident:
        fn_ref, out_ref, acc_ref, pos_ref = refs
    else:
        row_ref, col_ref, out_ref, acc_ref, pos_ref = refs

    i = pl.program_id(0)          # row tile ("parallel", megacore-sharded)
    k = pl.program_id(1)          # col tile (reduction, "arbitrary")
    half_blocks = b_pad // tn     # static python int

    if resident:
        row = fn_ref[pl.ds(pl.multiple_of(i * tm, tm), tm), :]   # (tm, D) bf16
        col = fn_ref[pl.ds(pl.multiple_of(k * tn, tn), tn), :]   # (tn, D) bf16
    else:
        row = row_ref[...]
        col = col_ref[...]

    # NT-form contraction on the shared last (lane-major) dim: bf16 in, f32 acc.
    logits = lax.dot_general(
        row, col, dimension_numbers=(((1,), (1,)), ((), ())),
        preferred_element_type=jnp.float32)          # (tm, tn) == sim / t

    # Rows carry rsqrt(t) each, so |logits| <= 1/t: constant-shift LSE.
    # NOTE: assumes a moderate temperature (t >~ 0.05); very small t would need
    # a per-row running max to avoid underflowing the whole row sum.
    ex = jnp.exp(logits - inv_t)

    @pl.when(k == 0)
    def _():
        acc_ref[...] = jnp.zeros_like(acc_ref)

    acc_ref[...] += jnp.sum(ex, axis=1, keepdims=True)    # online sum-exp

    # ---- masking correction only on tiles that need it -----------------------
    needs_mask = k == i                                    # self-similarity diag
    if b_valid < b_pad:                                    # pad-boundary cols
        needs_mask = needs_mask | (k == half_blocks - 1) | (k == n_col_blocks - 1)

    @pl.when(needs_mask)
    def _():
        r = i * tm + lax.broadcasted_iota(jnp.int32, (tm, tn), 0)
        c = k * tn + lax.broadcasted_iota(jnp.int32, (tm, tn), 1)
        invalid = r == c
        if b_valid < b_pad:
            c_in_half = c - jnp.where(c >= b_pad, b_pad, 0)
            invalid = invalid | (c_in_half >= b_valid)
        acc_ref[...] -= jnp.sum(jnp.where(invalid, ex, 0.0), axis=1, keepdims=True)

    # ---- positive-pair logit: because tm == tn and tm | b_pad, the partner
    # rows ((row + b_pad) mod N_pad) land in exactly one column tile and on its
    # local diagonal -----------------------------------------------------------
    k_pos = (i + half_blocks) % n_col_blocks

    @pl.when(k == k_pos)
    def _():
        lr = lax.broadcasted_iota(jnp.int32, (tm, tn), 0)
        lc = lax.broadcasted_iota(jnp.int32, (tm, tn), 1)
        pos_ref[...] = jnp.sum(jnp.where(lr == lc, logits, 0.0),
                               axis=1, keepdims=True)

    @pl.when(k == n_col_blocks - 1)
    def _():
        lse = inv_t + jnp.log(acc_ref[...])                # (tm, 1)
        out_ref[...] = lse - pos_ref[...]                  # per-row CE loss


def ntxent_loss(z_x, z_y, temperature=0.5, tile=512):
    assert z_x.shape == z_y.shape and z_x.ndim == 2
    B, D = z_x.shape

    # ---- host-side layout glue (tight 128-padding, tile dividing B_pad) ------
    D_pad = _round_up(D, 128)
    B_pad = _round_up(B, 128)
    tm = _pick_tile(B_pad, tile)          # row tile (also divides B_pad)
    tn = tm                               # col tile
    N_pad = 2 * B_pad
    n_row_blocks = N_pad // tm            # >= 2, keeps megacore sharding alive
    n_col_blocks = N_pad // tn

    def pad(a):
        return jnp.pad(a.astype(jnp.float32), ((0, B_pad - B), (0, D_pad - D)))

    feats = jnp.concatenate([pad(z_x), pad(z_y)], axis=0)   # (N_pad, D_pad) f32

    # ---- stage 1: normalize rows (single stream), bf16 out -------------------
    scale = 1.0 / math.sqrt(temperature)
    stage1_vmem = int(min(100 << 20, max(32 << 20,
                                         2 * tm * D_pad * (4 + 2) + (16 << 20))))
    fn = pl.pallas_call(
        functools.partial(_normalize_kernel, scale=scale),
        out_shape=jax.ShapeDtypeStruct((N_pad, D_pad), jnp.bfloat16),
        grid_spec=pltpu.PrefetchScalarGridSpec(
            num_scalar_prefetch=0,
            grid=(n_row_blocks,),
            in_specs=[pl.BlockSpec((tm, D_pad), lambda i: (i, 0))],
            out_specs=pl.BlockSpec((tm, D_pad), lambda i: (i, 0)),
        ),
        compiler_params=pltpu.CompilerParams(
            dimension_semantics=("parallel",),
            vmem_limit_bytes=stage1_vmem),
    )(feats)

    # ---- stage 2: row/col-tiled logits + online constant-shift LSE -----------
    fn_bytes = N_pad * D_pad * 2                       # bf16 resident slab
    tile_scratch = 6 * tm * tn * 4 + (16 << 20)        # (tm,tn) f32 temps + slack
    vmem_cap = _vmem_capacity_bytes()
    resident = (fn_bytes + tile_scratch) <= int(0.70 * vmem_cap)

    kernel = functools.partial(
        _ntxent_lse_kernel, tm=tm, tn=tn, b_valid=B, b_pad=B_pad,
        n_col_blocks=n_col_blocks, inv_t=1.0 / temperature, resident=resident)

    if resident:
        # whole normalized feature matrix lives in VMEM for the kernel duration
        in_specs = [pl.BlockSpec(memory_space=pltpu.VMEM)]
        operands = (fn,)
        vmem_need = fn_bytes + tile_scratch
    else:
        # fallback (v7x 64 MiB VMEM / huge N*D): stream column blocks from HBM;
        # the row block is only re-fetched when the row tile changes, and
        # tm >= ~512 keeps the column stream MXU-bound.
        in_specs = [pl.BlockSpec((tm, D_pad), lambda i, k: (i, 0)),
                    pl.BlockSpec((tn, D_pad), lambda i, k: (k, 0))]
        operands = (fn, fn)
        vmem_need = 4 * (tm + tn) * D_pad + tile_scratch

    vmem_limit = int(min(max(vmem_need, 32 << 20), 0.90 * vmem_cap, 128 << 20))

    per_row = pl.pallas_call(
        kernel,
        out_shape=jax.ShapeDtypeStruct((N_pad, 1), jnp.float32),
        grid_spec=pltpu.PrefetchScalarGridSpec(
            num_scalar_prefetch=0,
            grid=(n_row_blocks, n_col_blocks),
            in_specs=in_specs,
            out_specs=pl.BlockSpec((tm, 1), lambda i, k: (i, 0)),
            scratch_shapes=[pltpu.VMEM((tm, 1), jnp.float32),   # sum-exp acc
                            pltpu.VMEM((tm, 1), jnp.float32)],  # positive logit
        ),
        compiler_params=pltpu.CompilerParams(
            dimension_semantics=("parallel", "arbitrary"),
            vmem_limit_bytes=vmem_limit),
    )(*operands)

    # mean over the 2B real rows (padded rows excluded) -- tiny JAX glue so the
    # row-tile axis stays megacore-parallel inside the kernel.
    per_row = per_row[:, 0]
    loss = (jnp.sum(per_row[:B]) + jnp.sum(per_row[B_pad:B_pad + B])) / (2.0 * B)
    return loss


if __name__ == "__main__":
    key = jax.random.PRNGKey(0)
    kx, ky = jax.random.split(key)
    B, D = 4, 32
    z_x = jax.random.normal(kx, (B, D), dtype=jnp.float32)
    z_y = jax.random.normal(ky, (B, D), dtype=jnp.float32)

    loss = ntxent_loss(z_x, z_y, temperature=0.5)
    jax.block_until_ready(loss)

    # pure-JAX f32 reference of the same math (NT-Xent loss)
    f = jnp.concatenate([z_x, z_y], axis=0)
    f = f / jnp.maximum(jnp.linalg.norm(f, axis=1, keepdims=True), 1e-12)
    sim = (f @ f.T) / 0.5
    N = 2 * B
    eye = jnp.eye(N, dtype=bool)
    masked = jnp.where(eye, -jnp.inf, sim)
    lse = jax.scipy.special.logsumexp(masked, axis=1)
    pos = sim[jnp.arange(N), (jnp.arange(N) + B) % N]
    ref = jnp.mean(lse - pos)
    # bf16 MXU operands / bf16 feature residency vs. the f32 reference
    assert jnp.allclose(loss, ref, atol=5e-2, rtol=1e-2), (loss, ref)

    print("KERNEL_OK")
</pallas_src>

<mosaic_0001>
module attributes {stable_mosaic.version = 11 : i64} {
  func.func @_normalize_kernel(%arg0: i32, %arg1: memref<128x128xf32, #tpu.memory_space<vmem>>, %arg2: memref<128x128xbf16, #tpu.memory_space<vmem>>) attributes {dimension_semantics = [#tpu.dimension_semantics<parallel>], iteration_bounds = array<i64: 2>, scalar_prefetch = 0 : i64, scratch_operands = 0 : i64, tpu.core_type = #tpu.core_type<tc>, window_params = [{transform_indices = @transform_0, window_bounds = array<i64: 128, 128>}, {transform_indices = @transform_1, window_bounds = array<i64: 128, 128>}]} {
    %c0 = arith.constant 0 : index
    %c0_0 = arith.constant 0 : index
    %0 = vector.load %arg1[%c0, %c0_0] : memref<128x128xf32, #tpu.memory_space<vmem>>, vector<128x128xf32>
    %1 = arith.mulf %0, %0 : vector<128x128xf32>
    %cst = arith.constant dense<0.000000e+00> : vector<128xf32>
    %2 = vector.multi_reduction <add>, %1, %cst [1] : vector<128x128xf32> to vector<128xf32>
    %3 = vector.shape_cast %2 : vector<128xf32> to vector<128x1xf32>
    %cst_1 = arith.constant 1.000000e-24 : f32
    %4 = vector.broadcast %cst_1 : f32 to vector<128x1xf32>
    %5 = arith.maximumf %3, %4 : vector<128x1xf32>
    %6 = math.rsqrt %5 : vector<128x1xf32>
    %cst_2 = arith.constant 1.41421354 : f32
    %7 = vector.broadcast %cst_2 : f32 to vector<128x1xf32>
    %8 = arith.mulf %6, %7 : vector<128x1xf32>
    %9 = vector.broadcast %8 : vector<128x1xf32> to vector<128x128xf32>
    %10 = arith.mulf %0, %9 : vector<128x128xf32>
    %11 = arith.truncf %10 : vector<128x128xf32> to vector<128x128xbf16>
    %c0_3 = arith.constant 0 : index
    %c0_4 = arith.constant 0 : index
    %12 = vector.load %arg2[%c0_3, %c0_4] : memref<128x128xbf16, #tpu.memory_space<vmem>>, vector<128x128xbf16>
    tpu.vector_store %arg2[%c0_3, %c0_4], %11 {strides = array<i32>} : memref<128x128xbf16, #tpu.memory_space<vmem>>, vector<128x128xbf16>,
    return
  }
  func.func @transform_0(%arg0: i32) -> (i32, i32) {
    %c0_i32 = arith.constant 0 : i32
    %c0_i32_0 = arith.constant 0 : i32
    return %arg0, %c0_i32 : i32, i32
  }
  func.func @transform_1(%arg0: i32) -> (i32, i32) {
    %c0_i32 = arith.constant 0 : i32
    %c0_i32_0 = arith.constant 0 : i32
    return %arg0, %c0_i32 : i32, i32
  }
}

</mosaic_0001>

<llo_original>
// kernel: tpu_custom_call.1
$region0: #{tpu_custom_call.1}
  #allocation0 [shape = 'u32[]', space=smem, size = 0x4, offset = 0x4, fixed_abs, tag = 'smem constant byte address 0x4 - core index']
  #allocation1 [shape = 'u32[144,128]{1,0:T(1,128)}', space=vmem, size = 0x12000, scoped, tag = 'internal scratch']
  %s0 = inlined_call_operand.hbm [shape: f32[256,128], index: 0, kind: input, shape index: {}]
  %s1 = inlined_call_operand.hbm [shape: bf16[256,128], index: 1, kind: output, shape index: {}]
  %s2 = sld [smem:[#allocation0]]
  $region41: #{tpu_custom_call.1} parent=0
    _
  %s4 = ssub.s32 1, %s2
  %s5 = scalar_select 0, %s4, %s2
  $region1: #{tpu_custom_call.1} parent=0
    #allocation2 [shape = 'u8[131072]{0}', space=vmem, size = 0x20000, scoped, tag = 'input window, operand 0']
    #allocation3 [shape = 's32[2]{0}', space=sflag, size = 0x8, scoped, tag = 'scoped memory for tpu_custom_call.1']
    #allocation4 [shape = 's32[2]{0}', space=sflag, size = 0x8, scoped, tag = 'scoped memory for tpu_custom_call.1']
    #allocation5 [shape = 'u8[65536]{0}', space=vmem, size = 0x10000, scoped, tag = 'output window, operand 0']
    %6 = vsyncpa [#allocation3], 0
    %s7 = scalar_lea.sflag [#allocation3], 1
    %8 = vsyncpa %s7, 0
    %9 = vsyncpa [#allocation4], 0
    %s10 = scalar_lea.sflag [#allocation4], 1
    %11 = vsyncpa %s10, 0
    loop: start=0, step=1, limit=4
    $region2: #{tpu_custom_call.1} parent=1 // loop_pre_header
      _
    $region3: #{tpu_custom_call.1} parent=1 // loop_header
      %s13 = sphi 0, %s17
      %p14 = scmp.ge.s32.totalorder %s13, 4
      %s23 = sphi 0, %s25
      %s26 = sphi 0, %s23
      %s27 = sphi 0, %s26
      %s43 = sphi 0, %s27
      %s49 = sphi 0, %s51
      %s52 = sphi 0, %s49
      %s53 = sphi 0, %s52
      %s69 = sphi 0, %s53
    $region4: #{tpu_custom_call.1} parent=1 // loop_header_branch
      %16 = sbr.rel (%p14) target = $region8
    $region5: #{tpu_custom_call.1} parent=1 // loop_body
      %s18 = ssub.s32 %s13, 1
      %s19 = ssub.s32 %s13, 2
      %s20 = sadd.s32 %s13, 1
      %s21 = ssub.s32 %s13, %s20
      %p22 = scmp.eq.s32.totalorder %s21, 0
      %s24 = sadd.s32 %s23, 1
      %s25 = scalar_select %p22, %s23, %s24
      %p28 = pneg %p22
      %p29 = scmp.eq.s32.totalorder %s13, 1
      %p30 = por %p28, %p29
      %p31 = scmp.ne.s32.totalorder %s23, %s26
      %p32 = scmp.eq.s32.totalorder %s13, 0
      %p33 = por %p31, %p32
      %p34 = scmp.ne.s32.totalorder %s23, %s26
      %p35 = scmp.eq.s32.totalorder %s18, 1
      %p36 = por %p34, %p35
      %p37 = scmp.ne.s32.totalorder %s26, %s27
      %p38 = scmp.eq.s32.totalorder %s18, 0
      %p39 = por %p37, %p38
      %p40 = scmp.ne.s32.totalorder %s26, %s27
      %p41 = scmp.eq.s32.totalorder %s19, 1
      %p42 = por %p40, %p41
      %p44 = scmp.ne.s32.totalorder %s27, %s43
      %p45 = scmp.eq.s32.totalorder %s19, 0
      %p46 = por %p44, %p45
      %s47 = ssub.s32 %s13, %s20
      %p48 = scmp.eq.s32.totalorder %s47, 0
      %s50 = sadd.s32 %s49, 1
      %s51 = scalar_select %p48, %s49, %s50
      %p54 = pneg %p48
      %p55 = scmp.eq.s32.totalorder %s13, 1
      %p56 = por %p54, %p55
      %p57 = scmp.ne.s32.totalorder %s49, %s52
      %p58 = scmp.eq.s32.totalorder %s13, 0
      %p59 = por %p57, %p58
      %p60 = scmp.ne.s32.totalorder %s49, %s52
      %p61 = scmp.eq.s32.totalorder %s18, 1
      %p62 = por %p60, %p61
      %p63 = scmp.ne.s32.totalorder %s52, %s53
      %p64 = scmp.eq.s32.totalorder %s18, 0
      %p65 = por %p63, %p64
      %p66 = scmp.ne.s32.totalorder %s52, %s53
      %p67 = scmp.eq.s32.totalorder %s19, 1
      %p68 = por %p66, %p67
      %p70 = scmp.ne.s32.totalorder %s53, %s69
      %p71 = scmp.eq.s32.totalorder %s19, 0
      %p72 = por %p70, %p71
      %p73 = scmp.le.s32.totalorder 1, %s13
      %p74 = scmp.lt.s32.totalorder %s13, 3
      %p75 = pnand %p73, %p74
      %p76 = pneg %p75
      // Predicated region
      $region9: #{tpu_custom_call.1} parent=5 // pred_check
        _
      $region10: #{tpu_custom_call.1} parent=5 // pred_check_branch
        %78 = sbr.rel (%p75) target = $region12
      $region11: #{tpu_custom_call.1} parent=5 // pred_region
        %s79 = ssub.s32 %s13, 1
      $region12: #{tpu_custom_call.1} parent=5 // pred_fallthru
        _
      %p80 = scmp.lt.s32.totalorder %s13, 2
      // Predicated region
      $region13: #{tpu_custom_call.1} parent=5 // pred_check
        %p81 = pneg %p80
      $region14: #{tpu_custom_call.1} parent=5 // pred_check_branch
        %83 = sbr.rel (%p81) target = $region16
      $region15: #{tpu_custom_call.1} parent=5 // pred_region
        // Predicated region
        $region17: #{tpu_custom_call.1} parent=15 // pred_check
          %p84 = pneg %p33
        $region18: #{tpu_custom_call.1} parent=15 // pred_check_branch
          %86 = sbr.rel (%p84) target = $region20
        $region19: #{tpu_custom_call.1} parent=15 // pred_region
          %s87 = sand.u32 %s23, 1
          %s88 = scalar_lea.sflag [#allocation3], %s87
          %s89 = sand.u32 %s23, 1
          %s90 = smul.addr %s89, 128
          %s91 = scalar_lea.vmem [#allocation2], %s90
          %s92 = smul.u32 16, %s13
          %s94 = ssub.s32 2048, 2048
          %95 = vsyncadd %s88, %s94
          %s96 = smul.addr %s92, 128
          %s97 = scalar_lea.hbm %s0, %s96
          %s98 = sshll.u32 %s91, 4
          %s99 = int_to_ptr.vmem [resolvable:$true] %s98
          %104 = dma.hbm_to_vmem [thread:$0]  %s97, 2048, %s99, %s88, 128, 128, 8
        $region20: #{tpu_custom_call.1} parent=15 // pred_fallthru
          _
      $region16: #{tpu_custom_call.1} parent=5 // pred_fallthru
        _
      %p105 = scmp.le.s32.totalorder 1, %s13
      %p106 = scmp.lt.s32.totalorder %s13, 3
      %p107 = pnand %p105, %p106
      %p108 = pneg %p107
      // Predicated region
      $region21: #{tpu_custom_call.1} parent=5 // pred_check
        _
      $region22: #{tpu_custom_call.1} parent=5 // pred_check_branch
        %110 = sbr.rel (%p107) target = $region24
      $region23: #{tpu_custom_call.1} parent=5 // pred_region
        %s111 = ssub.s32 %s13, 1
        %s112 = sand.u32 %s26, 1
        %s113 = scalar_lea.sflag [#allocation3], %s112
        %s114 = sand.u32 %s26, 1
        %s115 = smul.addr %s114, 128
        %s116 = scalar_lea.vmem [#allocation2], %s115
        // Predicated region
        $region25: #{tpu_custom_call.1} parent=23 // pred_check
          %p117 = pneg %p39
        $region26: #{tpu_custom_call.1} parent=23 // pred_check_branch
          %119 = sbr.rel (%p117) target = $region28
        $region27: #{tpu_custom_call.1} parent=23 // pred_region
          %120 = dma.done %s113, 2048
        $region28: #{tpu_custom_call.1} parent=23 // pred_fallthru
          _
        %s121 = sand.u32 %s26, 1
        %s122 = scalar_lea.sflag [#allocation3], %s121
        %s123 = sand.u32 %s26, 1
        %s124 = smul.addr %s123, 128
        %s125 = scalar_lea.vmem [#allocation2], %s124
        %p126 = pneg %p39
        %p127 = pneg %p36
        %p128 = pneg %p65
        %p129 = pneg %p62
        %s130 = sand.u32 %s52, 1
        %s131 = scalar_lea.sflag [#allocation4], %s130
        %s132 = sand.u32 %s52, 1
        %s133 = smul.addr %s132, 64
        %s134 = scalar_lea.vmem [#allocation5], %s133
        %s135 = smul.u32 16, %s18
        %s136 = smul.u32 16, %s18
        %v137 = vld [vmem:[%s116] sm:$0xff]
        %v138 = vld [vmem:[%s116 + $0x8] sm:$0xff]
        %v139 = vld [vmem:[%s116 + $0x10] sm:$0xff]
        %v140 = vld [vmem:[%s116 + $0x18] sm:$0xff]
        %v141 = vld [vmem:[%s116 + $0x20] sm:$0xff]
        %v142 = vld [vmem:[%s116 + $0x28] sm:$0xff]
        %v143 = vld [vmem:[%s116 + $0x30] sm:$0xff]
        %v144 = vld [vmem:[%s116 + $0x38] sm:$0xff]
        %v145 = vld [vmem:[%s116 + $0x40] sm:$0xff]
        %v146 = vld [vmem:[%s116 + $0x48] sm:$0xff]
        %v147 = vld [vmem:[%s116 + $0x50] sm:$0xff]
        %v148 = vld [vmem:[%s116 + $0x58] sm:$0xff]
        %v149 = vld [vmem:[%s116 + $0x60] sm:$0xff]
        %v150 = vld [vmem:[%s116 + $0x68] sm:$0xff]
        %v151 = vld [vmem:[%s116 + $0x70] sm:$0xff]
        %v152 = vld [vmem:[%s116 + $0x78] sm:$0xff]
        %v153 = vmul.f32 %v137, %v137
        %v154 = vmul.f32 %v138, %v138
        %v155 = vmul.f32 %v139, %v139
        %v156 = vmul.f32 %v140, %v140
        %v157 = vmul.f32 %v141, %v141
        %v158 = vmul.f32 %v142, %v142
        %v159 = vmul.f32 %v143, %v143
        %v160 = vmul.f32 %v144, %v144
        %v161 = vmul.f32 %v145, %v145
        %v162 = vmul.f32 %v146, %v146
        %v163 = vmul.f32 %v147, %v147
        %v164 = vmul.f32 %v148, %v148
        %v165 = vmul.f32 %v149, %v149
        %v166 = vmul.f32 %v150, %v150
        %v167 = vmul.f32 %v151, %v151
        %v168 = vmul.f32 %v152, %v152
        %169 = vadd.xlane.f32.xlu0 %v153
        %v170 = vpop.xlane.xlu0 %169
        %171 = vadd.xlane.f32.xlu0 %v154
        %v172 = vpop.xlane.xlu0 %171
        %173 = vadd.xlane.f32.xlu0 %v155
        %v174 = vpop.xlane.xlu0 %173
        %175 = vadd.xlane.f32.xlu0 %v156
        %v176 = vpop.xlane.xlu0 %175
        %177 = vadd.xlane.f32.xlu0 %v157
        %v178 = vpop.xlane.xlu0 %177
        %179 = vadd.xlane.f32.xlu0 %v158
        %v180 = vpop.xlane.xlu0 %179
        %181 = vadd.xlane.f32.xlu0 %v159
        %v182 = vpop.xlane.xlu0 %181
        %183 = vadd.xlane.f32.xlu0 %v160
        %v184 = vpop.xlane.xlu0 %183
        %185 = vadd.xlane.f32.xlu0 %v161
        %v186 = vpop.xlane.xlu0 %185
        %187 = vadd.xlane.f32.xlu0 %v162
        %v188 = vpop.xlane.xlu0 %187
        %189 = vadd.xlane.f32.xlu0 %v163
        %v190 = vpop.xlane.xlu0 %189
        %191 = vadd.xlane.f32.xlu0 %v164
        %v192 = vpop.xlane.xlu0 %191
        %193 = vadd.xlane.f32.xlu0 %v165
        %v194 = vpop.xlane.xlu0 %193
        %195 = vadd.xlane.f32.xlu0 %v166
        %v196 = vpop.xlane.xlu0 %195
        %197 = vadd.xlane.f32.xlu0 %v167
        %v198 = vpop.xlane.xlu0 %197
        %199 = vadd.xlane.f32.xlu0 %v168
        %v200 = vpop.xlane.xlu0 %199
        %v201 = vmax.f32 %v170, 1e-24
        %v202 = vmax.f32 %v172, 1e-24
        %v203 = vmax.f32 %v174, 1e-24
        %v204 = vmax.f32 %v176, 1e-24
        %v205 = vmax.f32 %v178, 1e-24
        %v206 = vmax.f32 %v180, 1e-24
        %v207 = vmax.f32 %v182, 1e-24
        %v208 = vmax.f32 %v184, 1e-24
        %v209 = vmax.f32 %v186, 1e-24
        %v210 = vmax.f32 %v188, 1e-24
        %v211 = vmax.f32 %v190, 1e-24
        %v212 = vmax.f32 %v192, 1e-24
        %v213 = vmax.f32 %v194, 1e-24
        %v214 = vmax.f32 %v196, 1e-24
        %v215 = vmax.f32 %v198, 1e-24
        %v216 = vmax.f32 %v200, 1e-24
        %v217 = vrsqrt.pop %v201
        %v218 = vrsqrt.pop %v202
        %v219 = vrsqrt.pop %v203
        %v220 = vrsqrt.pop %v204
        %v221 = vrsqrt.pop %v205
        %v222 = vrsqrt.pop %v206
        %v223 = vrsqrt.pop %v207
        %v224 = vrsqrt.pop %v208
        %v225 = vrsqrt.pop %v209
        %v226 = vrsqrt.pop %v210
        %v227 = vrsqrt.pop %v211
        %v228 = vrsqrt.pop %v212
        %v229 = vrsqrt.pop %v213
        %v230 = vrsqrt.pop %v214
        %v231 = vrsqrt.pop %v215
        %v232 = vrsqrt.pop %v216
        %v233 = vmul.f32 %v217, 1.4142135
        %v234 = vmul.f32 %v218, 1.4142135
        %v235 = vmul.f32 %v219, 1.4142135
        %v236 = vmul.f32 %v220, 1.4142135
        %v237 = vmul.f32 %v221, 1.4142135
        %v238 = vmul.f32 %v222, 1.4142135
        %v239 = vmul.f32 %v223, 1.4142135
        %v240 = vmul.f32 %v224, 1.4142135
        %v241 = vmul.f32 %v225, 1.4142135
        %v242 = vmul.f32 %v226, 1.4142135
        %v243 = vmul.f32 %v227, 1.4142135
        %v244 = vmul.f32 %v228, 1.4142135
        %v245 = vmul.f32 %v229, 1.4142135
        %v246 = vmul.f32 %v230, 1.4142135
        %v247 = vmul.f32 %v231, 1.4142135
        %v248 = vmul.f32 %v232, 1.4142135
        %v249 = vmul.f32 %v137, %v233
        %v250 = vmul.f32 %v138, %v234
        %v251 = vmul.f32 %v139, %v235
        %v252 = vmul.f32 %v140, %v236
        %v253 = vmul.f32 %v141, %v237
        %v254 = vmul.f32 %v142, %v238
        %v255 = vmul.f32 %v143, %v239
        %v256 = vmul.f32 %v144, %v240
        %v257 = vmul.f32 %v145, %v241
        %v258 = vmul.f32 %v146, %v242
        %v259 = vmul.f32 %v147, %v243
        %v260 = vmul.f32 %v148, %v244
        %v261 = vmul.f32 %v149, %v245
        %v262 = vmul.f32 %v150, %v246
        %v263 = vmul.f32 %v151, %v247
        %v264 = vmul.f32 %v152, %v248
        %v265 = vpack.c.bf16 %v250, %v249
        %v266 = vpack.c.bf16 %v252, %v251
        %v267 = vpack.c.bf16 %v254, %v253
        %v268 = vpack.c.bf16 %v256, %v255
        %v269 = vpack.c.bf16 %v258, %v257
        %v270 = vpack.c.bf16 %v260, %v259
        %v271 = vpack.c.bf16 %v262, %v261
        %v272 = vpack.c.bf16 %v264, %v263
        %v281 = vunpack.c.l.b16 %v265
        %v282 = vunpack.c.h.b16 %v265
        %v283 = vunpack.c.l.b16 %v266
        %v284 = vunpack.c.h.b16 %v266
        %v285 = vunpack.c.l.b16 %v267
        %v286 = vunpack.c.h.b16 %v267
        %v287 = vunpack.c.l.b16 %v268
        %v288 = vunpack.c.h.b16 %v268
        %v289 = vunpack.c.l.b16 %v269
        %v290 = vunpack.c.h.b16 %v269
        %v291 = vunpack.c.l.b16 %v270
        %v292 = vunpack.c.h.b16 %v270
        %v293 = vunpack.c.l.b16 %v271
        %v294 = vunpack.c.h.b16 %v271
        %v295 = vunpack.c.l.b16 %v272
        %v296 = vunpack.c.h.b16 %v272
        %v297 = vpack.c.b16 %v281, %v281
        %v298 = vpack.c.b16 %v282, %v282
        %v299 = vpack.c.b16 %v283, %v283
        %v300 = vpack.c.b16 %v284, %v284
        %v301 = vpack.c.b16 %v285, %v285
        %v302 = vpack.c.b16 %v286, %v286
        %v303 = vpack.c.b16 %v287, %v287
        %v304 = vpack.c.b16 %v288, %v288
        %v305 = vpack.c.b16 %v289, %v289
        %v306 = vpack.c.b16 %v290, %v290
        %v307 = vpack.c.b16 %v291, %v291
        %v308 = vpack.c.b16 %v292, %v292
        %v309 = vpack.c.b16 %v293, %v293
        %v310 = vpack.c.b16 %v294, %v294
        %v311 = vpack.c.b16 %v295, %v295
        %v312 = vpack.c.b16 %v296, %v296
        %329 = vst [vmem:[%s134] sm:$0xf] %v297
        %330 = vst [vmem:[%s134 + $0x4] sm:$0xf] %v298
        %331 = vst [vmem:[%s134 + $0x8] sm:$0xf] %v299
        %332 = vst [vmem:[%s134 + $0xc] sm:$0xf] %v300
        %333 = vst [vmem:[%s134 + $0x10] sm:$0xf] %v301
        %334 = vst [vmem:[%s134 + $0x14] sm:$0xf] %v302
        %335 = vst [vmem:[%s134 + $0x18] sm:$0xf] %v303
        %336 = vst [vmem:[%s134 + $0x1c] sm:$0xf] %v304
        %337 = vst [vmem:[%s134 + $0x20] sm:$0xf] %v305
        %338 = vst [vmem:[%s134 + $0x24] sm:$0xf] %v306
        %339 = vst [vmem:[%s134 + $0x28] sm:$0xf] %v307
        %340 = vst [vmem:[%s134 + $0x2c] sm:$0xf] %v308
        %341 = vst [vmem:[%s134 + $0x30] sm:$0xf] %v309
        %342 = vst [vmem:[%s134 + $0x34] sm:$0xf] %v310
        %343 = vst [vmem:[%s134 + $0x38] sm:$0xf] %v311
        %344 = vst [vmem:[%s134 + $0x3c] sm:$0xf] %v312
        %s345 = sand.u32 %s52, 1
        %s346 = scalar_lea.sflag [#allocation4], %s345
        %s347 = sand.u32 %s52, 1
        %s348 = smul.addr %s347, 64
        %s349 = scalar_lea.vmem [#allocation5], %s348
        // Predicated region
        $region29: #{tpu_custom_call.1} parent=23 // pred_check
          %p350 = pneg %p62
        $region30: #{tpu_custom_call.1} parent=23 // pred_check_branch
          %352 = sbr.rel (%p350) target = $region32
        $region31: #{tpu_custom_call.1} parent=23 // pred_region
          %s353 = smul.u32 16, %s18
          %s355 = ssub.s32 1024, 1024
          %356 = vsyncadd %s346, %s355
          %s357 = smul.addr %s353, 64
          %s358 = scalar_lea.hbm %s1, %s357
          %s359 = sshll.u32 %s349, 4
          %s360 = int_to_ptr.vmem [resolvable:$true] %s359
          %365 = dma.vmem_to_hbm [thread:$0]  %s360, 1024, %s358, %s346, 64, 64, 4
        $region32: #{tpu_custom_call.1} parent=23 // pred_fallthru
          _
      $region24: #{tpu_custom_call.1} parent=5 // pred_fallthru
        _
      %p366 = scmp.le.s32.totalorder 2, %s13
      // Predicated region
      $region33: #{tpu_custom_call.1} parent=5 // pred_check
        %p367 = pneg %p366
      $region34: #{tpu_custom_call.1} parent=5 // pred_check_branch
        %369 = sbr.rel (%p367) target = $region36
      $region35: #{tpu_custom_call.1} parent=5 // pred_region
        %s370 = ssub.s32 %s13, 2
        // Predicated region
        $region37: #{tpu_custom_call.1} parent=35 // pred_check
          %p371 = pneg %p68
        $region38: #{tpu_custom_call.1} parent=35 // pred_check_branch
          %373 = sbr.rel (%p371) target = $region40
        $region39: #{tpu_custom_call.1} parent=35 // pred_region
          %s374 = sand.u32 %s53, 1
          %s375 = scalar_lea.sflag [#allocation4], %s374
          %s376 = sand.u32 %s53, 1
          %s377 = smul.addr %s376, 64
          %s378 = scalar_lea.vmem [#allocation5], %s377
          %379 = dma.done %s375, 1024
        $region40: #{tpu_custom_call.1} parent=35 // pred_fallthru
          _
      $region36: #{tpu_custom_call.1} parent=5 // pred_fallthru
        _
    $region6: #{tpu_custom_call.1} parent=1 // loop_footer
      %s17 = sadd.s32 1, %s13
    $region7: #{tpu_custom_call.1} parent=1 // loop_footer_branch
      %12 = sbr.rel target = $region3
    $region8: #{tpu_custom_call.1} parent=1 // loop_exit
      _
    %380 = vsyncpa [#allocation3], 1
    %s381 = scalar_lea.sflag [#allocation3], 1
    %382 = vsyncpa %s381, 1
    %383 = vsyncpa [#allocation4], 1
    %s384 = scalar_lea.sflag [#allocation4], 1
    %385 = vsyncpa %s384, 1

</llo_original>
